<compile_context>
chip_gen: v7x
topology: tpu7x:2x2x1
jax: 0.10.0
libtpu: 0.0.40
codegen_flags: <defaults>
</compile_context>

<pallas_src>
import math

import jax
import jax.numpy as jnp
import numpy as np
from jax.experimental import pallas as pl
from jax.experimental.pallas import tpu as pltpu


# -----------------------------------------------------------------------------
# Block / padding helpers
# -----------------------------------------------------------------------------
def _round_up(x, m):
    return ((x + m - 1) // m) * m


def _pick_blocks(n, row_block=None, col_block=None):
    """Row tile (sublane dim), contraction tile (Lhat columns), padded node count."""
    rb = row_block if row_block is not None else min(256, _round_up(n, 8))
    if col_block is None:
        cb = _round_up(n, rb)
        if cb > 2048:
            cb = 2048            # contraction-axis tiling bounds VMEM independent of N
    else:
        cb = col_block
    n_pad = _round_up(n, math.lcm(rb, cb))
    return n_pad, rb, cb


def _pad2(a, rows, cols):
    pr, pc = rows - a.shape[0], cols - a.shape[1]
    if pr == 0 and pc == 0:
        return a
    return jnp.pad(a, ((0, pr), (0, pc)))


# -----------------------------------------------------------------------------
# Kernel 1: step-0 fast path (H0 == 0 -- exactly what the module's forward does).
# With H == 0 the reset gate is irrelevant and every conv_h_* term reduces to its
# bias, so only the z gate and the candidate h remain.
#   acc  = sum_k L[i, k] @ XW1[k]                 (streaming MXU matmul, 64 lanes)
#   pre  = acc + XW0b[i]                          (VPU add; XW0b = X@W0_zh + b_zh)
#   Z    = sigmoid(pre[:, :F]) ; Ht = tanh(pre[:, F:])
#   out  = relu((1 - Z) * Ht) . wlin + blin       (VPU mul + lane reduce)
# -----------------------------------------------------------------------------
def gconv_gru_step0_kernel(l_ref, xw1_ref, xw0b_ref, wlin_ref, blin_ref,
                           out_ref, acc_ref):
    k = pl.program_id(1)

    @pl.when(k == 0)
    def _():
        acc_ref[...] = jnp.zeros_like(acc_ref)

    acc_ref[...] += jnp.dot(l_ref[...], xw1_ref[...],
                            preferred_element_type=jnp.float32)

    @pl.when(k == pl.num_programs(1) - 1)
    def _():
        pre = acc_ref[...] + xw0b_ref[...]                      # (rb, 2F), f32
        f = pre.shape[-1] // 2
        z = jax.nn.sigmoid(pre[:, :f])
        ht = jnp.tanh(pre[:, f:])
        h_relu = jnp.maximum((1.0 - z) * ht, 0.0)
        out_ref[...] = (jnp.sum(h_relu * wlin_ref[...], axis=-1, keepdims=True)
                        + blin_ref[...])


# -----------------------------------------------------------------------------
# Kernel 2a: general-cell gate pass.
#   acc  = sum_k L[i, k] @ XHW1[k]                (96 lanes: [z | r | x-part of h])
#   pre  = acc + XHW0b[i]
#   Z, R = sigmoid(pre[:, :F]), sigmoid(pre[:, F:2F])
#   HR   = H[i] * R
#   out  = [ Z | pre_h + HR @ Whh0 | HR @ Whh1 ]  (96 lanes)
# -----------------------------------------------------------------------------
def gconv_gru_gates_kernel(l_ref, xhw1_ref, xhw0b_ref, h_ref, whh0_ref, whh1_ref,
                           gates_ref, acc_ref):
    k = pl.program_id(1)

    @pl.when(k == 0)
    def _():
        acc_ref[...] = jnp.zeros_like(acc_ref)

    acc_ref[...] += jnp.dot(l_ref[...], xhw1_ref[...],
                            preferred_element_type=jnp.float32)

    @pl.when(k == pl.num_programs(1) - 1)
    def _():
        f = h_ref.shape[-1]
        pre = acc_ref[...] + xhw0b_ref[...]                     # (rb, 3F), f32
        z = jax.nn.sigmoid(pre[:, :f])
        r = jax.nn.sigmoid(pre[:, f:2 * f])
        hr = h_ref[...] * r                                     # f32 elementwise
        cdt = whh0_ref.dtype
        hr_c = hr.astype(cdt)
        preh = pre[:, 2 * f:] + jnp.dot(hr_c, whh0_ref[...],
                                        preferred_element_type=jnp.float32)
        hrw1 = jnp.dot(hr_c, whh1_ref[...], preferred_element_type=jnp.float32)
        gates_ref[:, :f] = z
        gates_ref[:, f:2 * f] = preh
        gates_ref[:, 2 * f:] = hrw1


# -----------------------------------------------------------------------------
# Kernel 2b: general-cell blend pass.
#   acc = sum_k L[i, k] @ HRW1[k]
#   Ht  = tanh(preh[i] + acc) ; Hn = Z[i]*H[i] + (1-Z[i])*Ht
#   out = relu(Hn) . wlin + blin
# -----------------------------------------------------------------------------
def gconv_gru_blend_kernel(l_ref, hrw1_ref, zph_ref, h_ref, wlin_ref, blin_ref,
                           out_ref, acc_ref):
    k = pl.program_id(1)

    @pl.when(k == 0)
    def _():
        acc_ref[...] = jnp.zeros_like(acc_ref)

    acc_ref[...] += jnp.dot(l_ref[...], hrw1_ref[...],
                            preferred_element_type=jnp.float32)

    @pl.when(k == pl.num_programs(1) - 1)
    def _():
        f = h_ref.shape[-1]
        zph = zph_ref[...]
        z = zph[:, :f]
        preh = zph[:, f:]
        ht = jnp.tanh(preh + acc_ref[...])
        hn = z * h_ref[...] + (1.0 - z) * ht                    # all f32
        h_relu = jnp.maximum(hn, 0.0)
        out_ref[...] = (jnp.sum(h_relu * wlin_ref[...], axis=-1, keepdims=True)
                        + blin_ref[...])


# -----------------------------------------------------------------------------
# Host-side parameter fusion: lane-dense 2-D weight slabs, pre-summed biases.
# Gate order: 0 = z (update), 1 = r (reset), 2 = h (candidate).
# -----------------------------------------------------------------------------
def build_fused_params(p, filters):
    f = filters
    b = p["bx"] + p["bh"]                                       # conv_x + conv_h biases
    fused = {}
    # step-0 (H == 0): only z and h gates matter.
    fused["w0_zh"] = jnp.concatenate([p["wx0"][0], p["wx0"][2]], axis=1)   # (Fin, 2F)
    fused["w1_zh"] = jnp.concatenate([p["wx1"][0], p["wx1"][2]], axis=1)   # (Fin, 2F)
    fused["b_zh"] = jnp.concatenate([b[0], b[2]], axis=1)                  # (1, 2F)
    # general cell: [X|H] operand slabs; h-column H-rows zeroed (HR handled later).
    zeros_h = jnp.zeros((f, f), jnp.float32)
    top0 = jnp.concatenate([p["wx0"][0], p["wx0"][1], p["wx0"][2]], axis=1)
    bot0 = jnp.concatenate([p["wh0"][0], p["wh0"][1], zeros_h], axis=1)
    fused["w0_full"] = jnp.concatenate([top0, bot0], axis=0)               # (Fin+F, 3F)
    top1 = jnp.concatenate([p["wx1"][0], p["wx1"][1], p["wx1"][2]], axis=1)
    bot1 = jnp.concatenate([p["wh1"][0], p["wh1"][1], zeros_h], axis=1)
    fused["w1_full"] = jnp.concatenate([top1, bot1], axis=0)               # (Fin+F, 3F)
    fused["whh0"] = p["wh0"][2]                                            # (F, F)
    fused["whh1"] = p["wh1"][2]                                            # (F, F)
    fused["b_all"] = jnp.concatenate([b[0], b[1], b[2]], axis=1)           # (1, 3F)
    fused["wlin_row"] = p["wlin"].T                                        # (1, F)
    fused["blin"] = p["blin"]                                              # (1, 1)
    return fused


# -----------------------------------------------------------------------------
# Wrappers
# -----------------------------------------------------------------------------
def _common_compiler_params(vmem_limit_bytes):
    return pltpu.CompilerParams(
        dimension_semantics=("parallel", "arbitrary"),
        vmem_limit_bytes=vmem_limit_bytes,
    )


def gconv_gru_step0(lhat, x, fused, *, row_block=None, col_block=None,
                    matmul_dtype=jnp.float32, vmem_limit_bytes=48 * 1024 * 1024):
    """H0 == 0 forward (the module's actual forward)."""
    n, _ = x.shape
    f = fused["wlin_row"].shape[-1]
    n_pad, rb, cb = _pick_blocks(n, row_block, col_block)

    lp = _pad2(lhat, n_pad, n_pad).astype(matmul_dtype)
    xp = _pad2(x, n_pad, x.shape[1])
    # Tiny XLA precomputes (re-association): K = Fin = 2 contraction done outside.
    xw1 = (xp @ fused["w1_zh"]).astype(matmul_dtype)                       # (Np, 2F)
    xw0b = xp @ fused["w0_zh"] + fused["b_zh"]                             # (Np, 2F) f32

    out = pl.pallas_call(
        gconv_gru_step0_kernel,
        out_shape=jax.ShapeDtypeStruct((n_pad, 1), jnp.float32),
        grid=(n_pad // rb, n_pad // cb),
        in_specs=[
            pl.BlockSpec((rb, cb), lambda i, k: (i, k)),       # Lhat tile (streamed)
            pl.BlockSpec((cb, 2 * f), lambda i, k: (k, 0)),    # X @ W1_zh, k-tile
            pl.BlockSpec((rb, 2 * f), lambda i, k: (i, 0)),    # X @ W0_zh + b, row tile
            pl.BlockSpec((1, f), lambda i, k: (0, 0)),         # Linear weight (row)
            pl.BlockSpec((1, 1), lambda i, k: (0, 0)),         # Linear bias
        ],
        out_specs=pl.BlockSpec((rb, 1), lambda i, k: (i, 0)),
        scratch_shapes=[pltpu.VMEM((rb, 2 * f), jnp.float32)],
        compiler_params=_common_compiler_params(vmem_limit_bytes),
    )(lp, xw1, xw0b, fused["wlin_row"], fused["blin"])
    return out[:n]


def gconv_gru_cell(lhat, x, h, fused, *, row_block=None, col_block=None,
                   matmul_dtype=jnp.float32, vmem_limit_bytes=48 * 1024 * 1024):
    """General GConvGRU cell (arbitrary H) + ReLU + Linear, two row-gridded passes."""
    n, fin = x.shape
    f = h.shape[-1]
    n_pad, rb, cb = _pick_blocks(n, row_block, col_block)

    lp = _pad2(lhat, n_pad, n_pad).astype(matmul_dtype)
    xp = _pad2(x, n_pad, fin)
    hp = _pad2(h, n_pad, f)                                    # kept f32 for gating
    xh = jnp.concatenate([xp, hp], axis=1)                     # (Np, Fin+F)
    # Tiny XLA precomputes (K = Fin+F = 34 contraction done outside).
    xhw1 = (xh @ fused["w1_full"]).astype(matmul_dtype)        # (Np, 3F)
    xhw0b = xh @ fused["w0_full"] + fused["b_all"]             # (Np, 3F) f32

    cp = _common_compiler_params(vmem_limit_bytes)
    grid = (n_pad // rb, n_pad // cb)

    # Pass 1: gates.  Output [Z | preh | HR@Whh1], lane width 3F = 96.
    gates = pl.pallas_call(
        gconv_gru_gates_kernel,
        out_shape=jax.ShapeDtypeStruct((n_pad, 3 * f), jnp.float32),
        grid=grid,
        in_specs=[
            pl.BlockSpec((rb, cb), lambda i, k: (i, k)),        # Lhat tile
            pl.BlockSpec((cb, 3 * f), lambda i, k: (k, 0)),     # [X|H] @ W1_full
            pl.BlockSpec((rb, 3 * f), lambda i, k: (i, 0)),     # [X|H] @ W0_full + b
            pl.BlockSpec((rb, f), lambda i, k: (i, 0)),         # H row tile (f32)
            pl.BlockSpec((f, f), lambda i, k: (0, 0)),          # Whh0
            pl.BlockSpec((f, f), lambda i, k: (0, 0)),          # Whh1
        ],
        out_specs=pl.BlockSpec((rb, 3 * f), lambda i, k: (i, 0)),
        scratch_shapes=[pltpu.VMEM((rb, 3 * f), jnp.float32)],
        compiler_params=cp,
    )(lp, xhw1, xhw0b, hp,
      fused["whh0"].astype(matmul_dtype), fused["whh1"].astype(matmul_dtype))

    zph = gates[:, :2 * f]                                      # [Z | preh], f32
    hrw1 = gates[:, 2 * f:].astype(matmul_dtype)                # (Np, F)

    # Pass 2: blend + ReLU + Linear.
    out = pl.pallas_call(
        gconv_gru_blend_kernel,
        out_shape=jax.ShapeDtypeStruct((n_pad, 1), jnp.float32),
        grid=grid,
        in_specs=[
            pl.BlockSpec((rb, cb), lambda i, k: (i, k)),        # Lhat tile
            pl.BlockSpec((cb, f), lambda i, k: (k, 0)),         # HR @ Whh1, k-tile
            pl.BlockSpec((rb, 2 * f), lambda i, k: (i, 0)),     # [Z | preh] row tile
            pl.BlockSpec((rb, f), lambda i, k: (i, 0)),         # H row tile (f32)
            pl.BlockSpec((1, f), lambda i, k: (0, 0)),          # Linear weight (row)
            pl.BlockSpec((1, 1), lambda i, k: (0, 0)),          # Linear bias
        ],
        out_specs=pl.BlockSpec((rb, 1), lambda i, k: (i, 0)),
        scratch_shapes=[pltpu.VMEM((rb, f), jnp.float32)],
        compiler_params=cp,
    )(lp, hrw1, zph, hp, fused["wlin_row"], fused["blin"])
    return out[:n]


def gconv_gru_recurrent_gcn_forward(x, edge_index, edge_weight, fused,
                                    *, matmul_dtype=jnp.float32):
    """Mirrors GConvGRU_RecurrentGCN.forward (single step, H starts at zeros)."""
    n = x.shape[0]
    lhat = scaled_laplacian(edge_index, edge_weight, n)
    return gconv_gru_step0(lhat, x, fused, matmul_dtype=matmul_dtype)


# -----------------------------------------------------------------------------
# Glue: dense scaled Laplacian from edge_index / edge_weight (PyG ChebConv sym,
# lambda_max = 2.0  ->  Lhat = L - I = -D^{-1/2} A D^{-1/2}).
# -----------------------------------------------------------------------------
def scaled_laplacian(edge_index, edge_weight, num_nodes, lambda_max=2.0):
    a = jnp.zeros((num_nodes, num_nodes), jnp.float32)
    a = a.at[edge_index[0], edge_index[1]].add(edge_weight)
    deg = jnp.sum(a, axis=1)
    dinv = jnp.where(deg > 0, 1.0 / jnp.sqrt(deg), 0.0)
    lap = jnp.eye(num_nodes, dtype=jnp.float32) - dinv[:, None] * a * dinv[None, :]
    return (2.0 / lambda_max) * lap - jnp.eye(num_nodes, dtype=jnp.float32)


# Pure-JAX reference (per-gate, un-fused math) used only to validate the kernels.
def ref_forward(lhat, x, h, p):
    b = p["bx"] + p["bh"]
    lx = lhat @ x
    lh = lhat @ h

    def cheb_x(g, a, la):
        return a @ p["wx0"][g] + la @ p["wx1"][g]

    def cheb_h(g, a, la):
        return a @ p["wh0"][g] + la @ p["wh1"][g]

    z = jax.nn.sigmoid(cheb_x(0, x, lx) + cheb_h(0, h, lh) + b[0])
    r = jax.nn.sigmoid(cheb_x(1, x, lx) + cheb_h(1, h, lh) + b[1])
    hr = h * r
    lhr = lhat @ hr
    ht = jnp.tanh(cheb_x(2, x, lx) + cheb_h(2, hr, lhr) + b[2])
    hn = z * h + (1.0 - z) * ht
    return jnp.maximum(hn, 0.0) @ p["wlin"] + p["blin"]


if __name__ == "__main__":
    N = 16        # number of graph nodes
    LAGS = 2      # in_channels of the GRU (train_dataset.features[-1])
    FILTERS = 32  # hidden size

    key = jax.random.PRNGKey(0)
    ks = jax.random.split(key, 10)

    def init(k, shape, scale=0.1):
        return scale * jax.random.normal(k, shape, jnp.float32)

    # Natural per-gate parameters (gate order 0=z, 1=r, 2=h), fused host-side below.
    params = {
        "wx0": init(ks[0], (3, LAGS, FILTERS)),       # conv_x_{z,r,h} Theta_0
        "wx1": init(ks[1], (3, LAGS, FILTERS)),       # conv_x_{z,r,h} Theta_1
        "wh0": init(ks[2], (3, FILTERS, FILTERS)),    # conv_h_{z,r,h} Theta_0
        "wh1": init(ks[3], (3, FILTERS, FILTERS)),    # conv_h_{z,r,h} Theta_1
        "bx":  init(ks[4], (3, 1, FILTERS)),          # conv_x_* biases
        "bh":  init(ks[5], (3, 1, FILTERS)),          # conv_h_* biases
        "wlin": init(ks[6], (FILTERS, 1)),            # Linear(32, 1) weight^T
        "blin": init(ks[7], (1, 1)),                  # Linear bias
    }
    fused = build_fused_params(params, FILTERS)

    # Deterministic bidirectional ring graph.
    src = jnp.arange(N)
    dst = (src + 1) % N
    edge_index = jnp.stack([jnp.concatenate([src, dst]),
                            jnp.concatenate([dst, src])])
    edge_weight = jnp.ones((2 * N,), jnp.float32)

    x = jax.random.normal(ks[8], (N, LAGS), jnp.float32)     # node features (lags=2)
    lhat = scaled_laplacian(edge_index, edge_weight, N)

    # --- Module forward (H0 == 0) via the fast-path kernel -------------------
    out0 = gconv_gru_recurrent_gcn_forward(x, edge_index, edge_weight, fused)
    out0 = jax.block_until_ready(out0)
    exp0 = ref_forward(lhat, x, jnp.zeros((N, FILTERS), jnp.float32), params)
    np.testing.assert_allclose(np.asarray(out0), np.asarray(exp0),
                               rtol=1e-3, atol=1e-3)
    assert out0.shape == (N, 1)

    # --- bf16 Lhat-streaming path (large-N bandwidth mode); loose tolerance ---
    out0_bf16 = gconv_gru_step0(lhat, x, fused, matmul_dtype=jnp.bfloat16)
    out0_bf16 = jax.block_until_ready(out0_bf16)
    np.testing.assert_allclose(np.asarray(out0_bf16), np.asarray(out0),
                               rtol=5e-2, atol=5e-2)

    # --- General recurrent cell with a nonzero hidden state ------------------
    h_rand = 0.5 * jax.random.normal(ks[9], (N, FILTERS), jnp.float32)
    out_gen = gconv_gru_cell(lhat, x, h_rand, fused)
    out_gen = jax.block_until_ready(out_gen)
    exp_gen = ref_forward(lhat, x, h_rand, params)
    np.testing.assert_allclose(np.asarray(out_gen), np.asarray(exp_gen),
                               rtol=1e-3, atol=1e-3)

    print("KERNEL_OK")
</pallas_src>

<mosaic_0001>
module attributes {stable_mosaic.version = 11 : i64} {
  func.func @gconv_gru_step0_kernel(%arg0: i32, %arg1: i32, %arg2: memref<16x16xf32, #tpu.memory_space<vmem>>, %arg3: memref<16x64xf32, #tpu.memory_space<vmem>>, %arg4: memref<16x64xf32, #tpu.memory_space<vmem>>, %arg5: memref<1x32xf32, #tpu.memory_space<vmem>>, %arg6: memref<1x1xf32, #tpu.memory_space<vmem>>, %arg7: memref<16x1xf32, #tpu.memory_space<vmem>>, %arg8: memref<16x64xf32, #tpu.memory_space<vmem>>) attributes {dimension_semantics = [#tpu.dimension_semantics<parallel>, #tpu.dimension_semantics<arbitrary>], iteration_bounds = array<i64: 1, 1>, scalar_prefetch = 0 : i64, scratch_operands = 1 : i64, tpu.core_type = #tpu.core_type<tc>, window_params = [{transform_indices = @transform_0, window_bounds = array<i64: 16, 16>}, {transform_indices = @transform_1, window_bounds = array<i64: 16, 64>}, {transform_indices = @transform_2, window_bounds = array<i64: 16, 64>}, {pipeline_mode = #tpu.pipeline_mode<synchronous>, transform_indices = @transform_3, window_bounds = array<i64: 1, 32>}, {pipeline_mode = #tpu.pipeline_mode<synchronous>, transform_indices = @transform_4, window_bounds = array<i64: 1, 1>}, {transform_indices = @transform_5, window_bounds = array<i64: 16, 1>}]} {
    %c0_i32 = arith.constant 0 : i32
    %0 = arith.cmpi eq, %arg1, %c0_i32 : i32
    %1 = arith.extui %0 : i1 to i32
    %c0_i32_0 = arith.constant 0 : i32
    %2 = arith.cmpi ne, %1, %c0_i32_0 : i32
    scf.if %2 {
      %cst_10 = arith.constant 0.000000e+00 : f32
      %12 = vector.broadcast %cst_10 : f32 to vector<16x64xf32>
      %c0_11 = arith.constant 0 : index
      %c0_12 = arith.constant 0 : index
      %13 = vector.load %arg8[%c0_11, %c0_12] : memref<16x64xf32, #tpu.memory_space<vmem>>, vector<16x64xf32>
      tpu.vector_store %arg8[%c0_11, %c0_12], %12 {strides = array<i32>} : memref<16x64xf32, #tpu.memory_space<vmem>>, vector<16x64xf32>,
    } else {
    }
    %c0 = arith.constant 0 : index
    %c0_1 = arith.constant 0 : index
    %3 = vector.load %arg8[%c0, %c0_1] : memref<16x64xf32, #tpu.memory_space<vmem>>, vector<16x64xf32>
    %c0_2 = arith.constant 0 : index
    %c0_3 = arith.constant 0 : index
    %4 = vector.load %arg2[%c0_2, %c0_3] : memref<16x16xf32, #tpu.memory_space<vmem>>, vector<16x16xf32>
    %c0_4 = arith.constant 0 : index
    %c0_5 = arith.constant 0 : index
    %5 = vector.load %arg3[%c0_4, %c0_5] : memref<16x64xf32, #tpu.memory_space<vmem>>, vector<16x64xf32>
    %cst = arith.constant dense<0.000000e+00> : vector<16x64xf32>
    %6 = tpu.matmul %4, %5, %cst {dimension_numbers = #tpu.dot_dimension_numbers<[1], [0], [0], [1], [0, 0, 1, 1], [], []>} : vector<16x16xf32>, vector<16x64xf32>, vector<16x64xf32> -> vector<16x64xf32>
    %7 = arith.addf %3, %6 : vector<16x64xf32>
    %c0_6 = arith.constant 0 : index
    %c0_7 = arith.constant 0 : index
    %8 = vector.load %arg8[%c0_6, %c0_7] : memref<16x64xf32, #tpu.memory_space<vmem>>, vector<16x64xf32>
    tpu.vector_store %arg8[%c0_6, %c0_7], %7 {strides = array<i32>} : memref<16x64xf32, #tpu.memory_space<vmem>>, vector<16x64xf32>,
    %c0_i32_8 = arith.constant 0 : i32
    %9 = arith.cmpi eq, %arg1, %c0_i32_8 : i32
    %10 = arith.extui %9 : i1 to i32
    %c0_i32_9 = arith.constant 0 : i32
    %11 = arith.cmpi ne, %10, %c0_i32_9 : i32
    scf.if %11 {
      %c0_10 = arith.constant 0 : index
      %c0_11 = arith.constant 0 : index
      %12 = vector.load %arg8[%c0_10, %c0_11] : memref<16x64xf32, #tpu.memory_space<vmem>>, vector<16x64xf32>
      %c0_12 = arith.constant 0 : index
      %c0_13 = arith.constant 0 : index
      %13 = vector.load %arg4[%c0_12, %c0_13] : memref<16x64xf32, #tpu.memory_space<vmem>>, vector<16x64xf32>
      %14 = arith.addf %12, %13 : vector<16x64xf32>
      %15 = vector.extract_strided_slice %14 {offsets = [0, 0], sizes = [16, 32], strides = [1, 1]} : vector<16x64xf32> to vector<16x32xf32>
      %16 = arith.negf %15 : vector<16x32xf32>
      %17 = math.exp %16 : vector<16x32xf32>
      %cst_14 = arith.constant 1.000000e+00 : f32
      %18 = vector.broadcast %cst_14 : f32 to vector<16x32xf32>
      %19 = arith.addf %18, %17 : vector<16x32xf32>
      %20 = arith.divf %18, %19 : vector<16x32xf32>
      %21 = vector.extract_strided_slice %14 {offsets = [0, 32], sizes = [16, 32], strides = [1, 1]} : vector<16x64xf32> to vector<16x32xf32>
      %22 = math.tanh %21 : vector<16x32xf32>
      %cst_15 = arith.constant 1.000000e+00 : f32
      %23 = vector.broadcast %cst_15 : f32 to vector<16x32xf32>
      %24 = arith.subf %23, %20 : vector<16x32xf32>
      %25 = arith.mulf %24, %22 : vector<16x32xf32>
      %cst_16 = arith.constant 0.000000e+00 : f32
      %26 = vector.broadcast %cst_16 : f32 to vector<16x32xf32>
      %27 = arith.maximumf %25, %26 : vector<16x32xf32>
      %c0_17 = arith.constant 0 : index
      %c0_18 = arith.constant 0 : index
      %28 = vector.load %arg5[%c0_17, %c0_18] : memref<1x32xf32, #tpu.memory_space<vmem>>, vector<1x32xf32>
      %29 = vector.broadcast %28 : vector<1x32xf32> to vector<16x32xf32>
      %30 = arith.mulf %27, %29 : vector<16x32xf32>
      %cst_19 = arith.constant dense<0.000000e+00> : vector<16xf32>
      %31 = vector.multi_reduction <add>, %30, %cst_19 [1] : vector<16x32xf32> to vector<16xf32>
      %32 = vector.shape_cast %31 : vector<16xf32> to vector<16x1xf32>
      %c0_20 = arith.constant 0 : index
      %c0_21 = arith.constant 0 : index
      %33 = vector.load %arg6[%c0_20, %c0_21] : memref<1x1xf32, #tpu.memory_space<vmem>>, vector<1x1xf32>
      %34 = vector.broadcast %33 : vector<1x1xf32> to vector<16x1xf32>
      %35 = arith.addf %32, %34 : vector<16x1xf32>
      %c0_22 = arith.constant 0 : index
      %c0_23 = arith.constant 0 : index
      %36 = vector.load %arg7[%c0_22, %c0_23] : memref<16x1xf32, #tpu.memory_space<vmem>>, vector<16x1xf32>
      tpu.vector_store %arg7[%c0_22, %c0_23], %35 {strides = array<i32>} : memref<16x1xf32, #tpu.memory_space<vmem>>, vector<16x1xf32>,
    } else {
    }
    return
  }
  func.func @transform_0(%arg0: i32, %arg1: i32) -> (i32, i32) {
    %c0_i32 = arith.constant 0 : i32
    return %arg0, %arg1 : i32, i32
  }
  func.func @transform_1(%arg0: i32, %arg1: i32) -> (i32, i32) {
    %c0_i32 = arith.constant 0 : i32
    %c0_i32_0 = arith.constant 0 : i32
    return %arg1, %c0_i32 : i32, i32
  }
  func.func @transform_2(%arg0: i32, %arg1: i32) -> (i32, i32) {
    %c0_i32 = arith.constant 0 : i32
    %c0_i32_0 = arith.constant 0 : i32
    return %arg0, %c0_i32 : i32, i32
  }
  func.func @transform_3(%arg0: i32, %arg1: i32) -> (i32, i32) {
    %c0_i32 = arith.constant 0 : i32
    %c0_i32_0 = arith.constant 0 : i32
    %c0_i32_1 = arith.constant 0 : i32
    return %c0_i32, %c0_i32_0 : i32, i32
  }
  func.func @transform_4(%arg0: i32, %arg1: i32) -> (i32, i32) {
    %c0_i32 = arith.constant 0 : i32
    %c0_i32_0 = arith.constant 0 : i32
    %c0_i32_1 = arith.constant 0 : i32
    return %c0_i32, %c0_i32_0 : i32, i32
  }
  func.func @transform_5(%arg0: i32, %arg1: i32) -> (i32, i32) {
    %c0_i32 = arith.constant 0 : i32
    %c0_i32_0 = arith.constant 0 : i32
    return %arg0, %c0_i32 : i32, i32
  }
}

</mosaic_0001>

<llo_original>
// kernel: tpu_custom_call.1
$region0: #{tpu_custom_call.1}
  #allocation0 [shape = 'u32[]', space=smem, size = 0x4, offset = 0x4, fixed_abs, tag = 'smem constant byte address 0x4 - core index']
  #allocation1 [shape = 'u32[144,128]{1,0:T(1,128)}', space=vmem, size = 0x12000, scoped, tag = 'internal scratch']
  #allocation2 [shape = 'f32[16,64]{1,0:T(8,128)}', space=vmem, size = 0x2000, scoped, tag = 'scratch operand']
  #allocation3 [shape = 'f32[1,1]{1,0:T(1,128)S(1)}', space=vmem, size = 0x200, scoped, tag = 'scoped memory for tpu_custom_call.1']
  %s0 = inlined_call_operand.hbm [shape: f32[16,16], index: 0, kind: input, shape index: {}]
  %s1 = inlined_call_operand.hbm [shape: f32[16,64], index: 1, kind: input, shape index: {}]
  %s2 = inlined_call_operand.hbm [shape: f32[16,64], index: 2, kind: input, shape index: {}]
  %s3 = inlined_call_operand.vmem [shape: f32[1,32], index: 3, kind: input, shape index: {}]
  %s4 = inlined_call_operand.<no memory space> [shape: f32[1,1], index: 4, kind: input, shape index: {}]
  %s5 = inlined_call_operand.vmem [shape: f32[16,1], index: 5, kind: output, shape index: {}]
  %s6 = sld [smem:[#allocation0]]
  $region50: #{tpu_custom_call.1} parent=0
    _
  %s8 = ssub.s32 1, %s6
  %s9 = scalar_select 0, %s8, %s6
  %v10 = vstv %s4
  %11 = vst [vmem:[#allocation3] sm:$0x1] %v10
  $region1: #{tpu_custom_call.1} parent=0
    #allocation4 [shape = 'u8[8192]{0}', space=vmem, size = 0x2000, scoped, tag = 'input window, operand 0, single buffered']
    #allocation5 [shape = 's32[1]{0}', space=sflag, size = 0x4, scoped, tag = 'scoped memory for tpu_custom_call.1']
    #allocation6 [shape = 'u8[8192]{0}', space=vmem, size = 0x2000, scoped, tag = 'input window, operand 1, single buffered']
    #allocation7 [shape = 's32[1]{0}', space=sflag, size = 0x4, scoped, tag = 'scoped memory for tpu_custom_call.1']
    #allocation8 [shape = 'u8[8192]{0}', space=vmem, size = 0x2000, scoped, tag = 'input window, operand 2, single buffered']
    %12 = vsyncpa [#allocation5], 0
    %13 = vsyncpa [#allocation7], 0
    // Predicated region
    $region2: #{tpu_custom_call.1} parent=1 // pred_check
      _
    $region3: #{tpu_custom_call.1} parent=1 // pred_check_branch
      %15 = sbr.rel (0) target = $region5
    $region4: #{tpu_custom_call.1} parent=1 // pred_region
      %s17 = ssub.s32 256, 256
      %18 = vsyncadd [#allocation5], %s17
      %s19 = sshll.u32 [#allocation4], 4
      %s20 = int_to_ptr.vmem [resolvable:$true] %s19
      %25 = dma.hbm_to_vmem [thread:$0]  %s0, 256, %s20, [#allocation5], 128, 128, 8
    $region5: #{tpu_custom_call.1} parent=1 // pred_fallthru
      _
    // Predicated region
    $region6: #{tpu_custom_call.1} parent=1 // pred_check
      _
    $region7: #{tpu_custom_call.1} parent=1 // pred_check_branch
      %27 = sbr.rel (0) target = $region9
    $region8: #{tpu_custom_call.1} parent=1 // pred_region
      %s29 = ssub.s32 256, 256
      %30 = vsyncadd [#allocation7], %s29
      %s31 = sshll.u32 [#allocation6], 4
      %s32 = int_to_ptr.vmem [resolvable:$true] %s31
      %37 = dma.hbm_to_vmem [thread:$0]  %s1, 256, %s32, [#allocation7], 128, 128, 8
    $region9: #{tpu_custom_call.1} parent=1 // pred_fallthru
      _
    // Predicated region
    $region10: #{tpu_custom_call.1} parent=1 // pred_check
      _
    $region11: #{tpu_custom_call.1} parent=1 // pred_check_branch
      %39 = sbr.rel (0) target = $region13
    $region12: #{tpu_custom_call.1} parent=1 // pred_region
      %s41 = ssub.s32 256, 256
      %42 = vsyncadd [#allocation7], %s41
      %s43 = sshll.u32 [#allocation8], 4
      %s44 = int_to_ptr.vmem [resolvable:$true] %s43
      %49 = dma.hbm_to_vmem [thread:$0]  %s2, 256, %s44, [#allocation7], 128, 128, 8
    $region13: #{tpu_custom_call.1} parent=1 // pred_fallthru
      _
    // Predicated region
    $region14: #{tpu_custom_call.1} parent=1 // pred_check
      _
    $region15: #{tpu_custom_call.1} parent=1 // pred_check_branch
      %51 = sbr.rel (0) target = $region17
    $region16: #{tpu_custom_call.1} parent=1 // pred_region
      _
    $region17: #{tpu_custom_call.1} parent=1 // pred_fallthru
      _
    // Predicated region
    $region18: #{tpu_custom_call.1} parent=1 // pred_check
      _
    $region19: #{tpu_custom_call.1} parent=1 // pred_check_branch
      %53 = sbr.rel (0) target = $region21
    $region20: #{tpu_custom_call.1} parent=1 // pred_region
      _
    $region21: #{tpu_custom_call.1} parent=1 // pred_fallthru
      _
    // Predicated region
    $region22: #{tpu_custom_call.1} parent=1 // pred_check
      _
    $region23: #{tpu_custom_call.1} parent=1 // pred_check_branch
      %55 = sbr.rel (0) target = $region25
    $region24: #{tpu_custom_call.1} parent=1 // pred_region
      %56 = dma.done [#allocation5], 256
    $region25: #{tpu_custom_call.1} parent=1 // pred_fallthru
      _
    // Predicated region
    $region26: #{tpu_custom_call.1} parent=1 // pred_check
      _
    $region27: #{tpu_custom_call.1} parent=1 // pred_check_branch
      %58 = sbr.rel (0) target = $region29
    $region28: #{tpu_custom_call.1} parent=1 // pred_region
      %59 = dma.done [#allocation7], 256
    $region29: #{tpu_custom_call.1} parent=1 // pred_fallthru
      _
    // Predicated region
    $region30: #{tpu_custom_call.1} parent=1 // pred_check
      _
    $region31: #{tpu_custom_call.1} parent=1 // pred_check_branch
      %61 = sbr.rel (0) target = $region33
    $region32: #{tpu_custom_call.1} parent=1 // pred_region
      %62 = dma.done [#allocation7], 256
    $region33: #{tpu_custom_call.1} parent=1 // pred_fallthru
      _
    %p63 = scmp.eq.s32.totalorder 0, 0
    // Predicated region
    $region34: #{tpu_custom_call.1} parent=1 // pred_check
      %p64 = pneg %p63
    $region35: #{tpu_custom_call.1} parent=1 // pred_check_branch
      %66 = sbr.rel (%p64) target = $region37
    $region36: #{tpu_custom_call.1} parent=1 // pred_region
      %vm67 = vcmask 523264
      %68 = vst.msk [vmem:[#allocation2] sm:$0xff] %vm67, 0.0
      %69 = vst.msk [vmem:[#allocation2 + $0x8] sm:$0xff] %vm67, 0.0
    $region37: #{tpu_custom_call.1} parent=1 // pred_fallthru
      _
    %v70 = vld [vmem:[#allocation2] sm:$0xff]
    %v71 = vld [vmem:[#allocation2 + $0x8] sm:$0xff]
    %v72 = vld [vmem:[#allocation4] sm:$0xff]
    %v73 = vld [vmem:[#allocation4 + $0x8] sm:$0xff]
    %v74 = vld [vmem:[#allocation6] sm:$0xff]
    %v75 = vld [vmem:[#allocation6 + $0x8] sm:$0xff]
    %vm76 = vcmask 130048
    %v78 = vsel %vm76, %v72, 0
    %v81 = vsel %vm76, %v73, 0
    %83 = vmatprep.subr.mxu0 0.0
    %84 = vmatpush1.msra.mxu0 %v74
    %85 = vmatprep.subr.mxu0 0.0
    %86 = vmatpush1.msra.mxu0 %v75
    %87 = vmatprep.subr.mxu0 0.0
    %88 = vmatpush1.msra.mxu0 0.0
    %89 = vmatprep.subr.mxu0 0.0
    %90 = vmatpush1.msra.mxu0 0.0
    %91 = vmatprep.subr.mxu0 0.0
    %92 = vmatpush1.msra.mxu0 0.0
    %93 = vmatprep.subr.mxu0 0.0
    %94 = vmatpush1.msra.mxu0 0.0
    %95 = vmatprep.subr.mxu0 0.0
    %96 = vmatpush1.msra.mxu0 0.0
    %97 = vmatprep.subr.mxu0 0.0
    %98 = vmatpush1.msra.mxu0 0.0
    %99 = vmatprep.subr.mxu0 0.0
    %100 = vmatpush1.msra.mxu0 0.0
    %101 = vmatprep.subr.mxu0 0.0
    %102 = vmatpush1.msra.mxu0 0.0
    %103 = vmatprep.subr.mxu0 0.0
    %104 = vmatpush1.msra.mxu0 0.0
    %105 = vmatprep.subr.mxu0 0.0
    %106 = vmatpush1.msra.mxu0 0.0
    %107 = vmatprep.subr.mxu0 0.0
    %108 = vmatpush1.msra.mxu0 0.0
    %109 = vmatprep.subr.mxu0 0.0
    %110 = vmatpush1.msra.mxu0 0.0
    %111 = vmatprep.subr.mxu0 0.0
    %112 = vmatpush1.msra.mxu0 0.0
    %113 = vmatprep.subr.mxu0 0.0
    %114 = vmatpush1.msra.mxu0 0.0
    %115 = vmatprep.subr.mxu0 0.0
    %116 = vmatpush1.msra.mxu0 0.0
    %117 = vmatprep.subr.mxu0 0.0
    %118 = vmatpush1.msra.mxu0 0.0
    %119 = vmatprep.subr.mxu0 0.0
    %120 = vmatpush1.msra.mxu0 0.0
    %121 = vmatprep.subr.mxu0 0.0
    %122 = vmatpush1.msra.mxu0 0.0
    %123 = vmatprep.subr.mxu0 0.0
    %124 = vmatpush1.msra.mxu0 0.0
    %125 = vmatprep.subr.mxu0 0.0
    %126 = vmatpush1.msra.mxu0 0.0
    %127 = vmatprep.subr.mxu0 0.0
    %128 = vmatpush1.msra.mxu0 0.0
    %129 = vmatprep.subr.mxu0 0.0
    %130 = vmatpush1.msra.mxu0 0.0
    %131 = vmatprep.subr.mxu0 0.0
    %132 = vmatpush1.msra.mxu0 0.0
    %133 = vmatprep.subr.mxu0 0.0
    %134 = vmatpush1.msra.mxu0 0.0
    %135 = vmatprep.subr.mxu0 0.0
    %136 = vmatpush1.msra.mxu0 0.0
    %137 = vmatprep.subr.mxu0 0.0
    %138 = vmatpush1.msra.mxu0 0.0
    %139 = vmatprep.subr.mxu0 0.0
    %140 = vmatpush1.msra.mxu0 0.0
    %141 = vmatprep.subr.mxu0 0.0
    %142 = vmatpush1.msra.mxu0 0.0
    %143 = vmatprep.subr.mxu0 0.0
    %144 = vmatpush1.msra.mxu0 0.0
    %145 = vmatprep.subr.mxu0 0.0
    %146 = vmatpush1.msra.mxu0 0.0
    %147 = vmatprep.mubr.f32.mxu0 0.0
    %148 = vmatmul.mubr.f32.gmra.mrb[0].mxu0 %v78
    %v149 = vpop.f32.mrb[0].mxu0
    %v150 = vadd.f32 0.0, %v149
    %v151 = vpop.f32.mrb[0].mxu0
    %152 = vmatprep.mubr.f32.mxu0 0.0
    %153 = vmatmul.mubr.f32.gmra.mrb[0].mxu0 %v81
    %v154 = vpop.f32.mrb[0].mxu0
    %v155 = vadd.f32 0.0, %v154
    %v156 = vpop.f32.mrb[0].mxu0
    %157 = vdwg.mxu0
    %v158 = vadd.f32 %v70, %v150
    %v159 = vadd.f32 %v71, %v155
    %vm160 = vcmask 523264
    %161 = vst.msk [vmem:[#allocation2] sm:$0xff] %vm160, %v158
    %162 = vst.msk [vmem:[#allocation2 + $0x8] sm:$0xff] %vm160, %v159
    // Predicated region
    $region38: #{tpu_custom_call.1} parent=1 // pred_check
      %p163 = pneg %p63
    $region39: #{tpu_custom_call.1} parent=1 // pred_check_branch
      %165 = sbr.rel (%p163) target = $region41
    $region40: #{tpu_custom_call.1} parent=1 // pred_region
      %v166 = vld [vmem:[#allocation2] sm:$0xff]
      %v167 = vld [vmem:[#allocation2 + $0x8] sm:$0xff]
      %v168 = vld [vmem:[#allocation8] sm:$0xff]
      %v169 = vld [vmem:[#allocation8 + $0x8] sm:$0xff]
      %v170 = vadd.f32 %v166, %v168
      %v171 = vadd.f32 %v167, %v169
      %v172 = vxor.u32 %v170, 2147483648
      %v173 = vxor.u32 %v171, 2147483648
      %v174 = vmul.f32 %v172, 1.442695
      %v175 = vpow.pop %v174
      %v176 = vmul.f32 %v173, 1.442695
      %v177 = vpow.pop %v176
      %v178 = vadd.f32 %v175, 1.0
      %v179 = vadd.f32 %v177, 1.0
      %v180 = vrcp.pop %v178
      %v181 = vmul.f32 1.0, %v180
      %v182 = vrcp.pop %v179
      %v183 = vmul.f32 1.0, %v182
      %v184 = vtanh.pop %v170
      %v185 = vtanh.pop %v171
      %v186 = vsub.f32 1.0, %v181
      %v187 = vsub.f32 1.0, %v183
      %190 = vrot.lane.b32.xlu0 %v184, 96
      %v191 = vpop.permute.xlu0 %190
      %192 = vrot.lane.b32.xlu0 %v185, 96
      %v193 = vpop.permute.xlu0 %192
      %v196 = vmul.f32 %v186, %v191
      %v197 = vmul.f32 %v187, %v193
      %v198 = vmax.f32 %v196, 0.0
      %v199 = vmax.f32 %v197, 0.0
      %v200 = vld [vmem:[%s3] sm:$0x1]
      %v202 = vlaneseq
      %v203 = vshrl.u32 %v202, 7
      %v204 = vsub.s32 0, %v203
      %v205 = vrot.slane %v200, %v204
      %v207 = vmul.f32 %v198, %v205
      %v208 = vmul.f32 %v199, %v205
      %vm209 = vcmask 261120
      %v210 = vsel %vm209, %v207, 0.0
      %211 = vadd.xlane.f32.xlu0 %v210
      %v212 = vpop.xlane.xlu0 %211
      %v213 = vsel %vm209, %v208, 0.0
      %214 = vadd.xlane.f32.xlu0 %v213
      %v215 = vpop.xlane.xlu0 %214
      %v216 = vld [vmem:[#allocation3] sm:$0x1]
      %v218 = vlaneseq
      %v219 = vshrl.u32 %v218, 7
      %v220 = vsub.s32 0, %v219
      %v221 = vrot.slane %v216, %v220
      %v223 = vadd.f32 %v212, %v221
      %v224 = vadd.f32 %v215, %v221
      %vm225 = vcmask 7168
      %226 = vst.msk [vmem:[%s5] sm:$0xff] %vm225, %v223
      %227 = vst.msk [vmem:[%s5 + $0x8] sm:$0xff] %vm225, %v224
    $region41: #{tpu_custom_call.1} parent=1 // pred_fallthru
      _
    // Predicated region
    $region42: #{tpu_custom_call.1} parent=1 // pred_check
      _
    $region43: #{tpu_custom_call.1} parent=1 // pred_check_branch
      %229 = sbr.rel (0) target = $region45
    $region44: #{tpu_custom_call.1} parent=1 // pred_region
      _
    $region45: #{tpu_custom_call.1} parent=1 // pred_fallthru
      _
    // Predicated region
    $region46: #{tpu_custom_call.1} parent=1 // pred_check
      _
    $region47: #{tpu_custom_call.1} parent=1 // pred_check_branch
      %231 = sbr.rel (0) target = $region49
    $region48: #{tpu_custom_call.1} parent=1 // pred_region
      _
    $region49: #{tpu_custom_call.1} parent=1 // pred_fallthru
      _
    %232 = vsyncpa [#allocation5], 1
    %233 = vsyncpa [#allocation7], 1

</llo_original>
